<compile_context>
chip_gen: v6e
topology: v6e:2x2x1
jax: 0.10.0
libtpu: 0.0.40
codegen_flags: <defaults>
</compile_context>

<pallas_src>
import functools

import jax
import jax.numpy as jnp
import numpy as np
from jax.experimental import pallas as pl
from jax.experimental.pallas import tpu as pltpu

PAF_FACTOR = 0.001

_LANE = 128
# ~2 MiB of f32 elements per block: large enough to stream near the HBM
# roofline, small enough that input buffers + accumulators + temporaries fit
# comfortably in VMEM on every TPU generation.
_TARGET_BLOCK_ELEMS = (2 * 1024 * 1024) // 4
_VMEM_LIMIT_BYTES = 40 * 1024 * 1024


def _round_up(x, m):
    return ((x + m - 1) // m) * m


def _pick_tiles(n_chan, l_total):
    """Pick a (c_tile, l_tile) block for (B, C, L = w*h) inputs.

    * l_tile is lane-dense (a multiple of 128).
    * c_tile is a divisor of n_chan that is either a multiple of 8 or all of
      n_chan, so the sublane dim of the block stays aligned.
    * The block targets ~_TARGET_BLOCK_ELEMS elements.
    """
    l_full = _round_up(l_total, _LANE)
    cands = sorted({d for d in range(8, n_chan + 1, 8) if n_chan % d == 0}
                   | {n_chan})
    c_tile = cands[0]
    if c_tile * l_full > _TARGET_BLOCK_ELEMS:
        # Large spatial extent: tile it; keep the smallest legal channel
        # grouping (more channel blocks -> better megacore load balance).
        l_tile = max(_LANE, (_TARGET_BLOCK_ELEMS // c_tile // _LANE) * _LANE)
    else:
        # Small heatmaps: one lane-dense spatial tile; group channels so each
        # DMA is one large contiguous transfer and grid steps drop by c_tile.
        l_tile = l_full
        for d in cands:
            if d * l_tile <= _TARGET_BLOCK_ELEMS:
                c_tile = d
    return c_tile, l_tile


def _partial_lse_kernel(x_ref, om_ref, ol_ref, m_acc, l_acc, *,
                        c_tile, l_tile, l_total, masked):
    """Streaming logsumexp partials for one (batch, channel-block).

    Grid = (batch, channel_block, spatial_tile); spatial is the innermost
    reduction axis.  The input block is (c_tile, l_tile) with the flattened
    w*h axis on the lane dimension.  Running vector accumulators m (max) and
    l (sum of exp(x - m)) live in VMEM scratch; the per-tile update is purely
    elementwise, and the cross-lane reduction runs once in the final step,
    writing per-channel partial (m, l) for this batch element.
    """
    s = pl.program_id(2)
    n_s = pl.num_programs(2)

    @pl.when(s == 0)
    def _():
        m_acc[...] = jnp.full((c_tile, l_tile), -jnp.inf, jnp.float32)
        l_acc[...] = jnp.zeros((c_tile, l_tile), jnp.float32)

    x = x_ref[...].astype(jnp.float32)                       # (c_tile, l_tile)
    if masked:
        col = s * l_tile + jax.lax.broadcasted_iota(
            jnp.int32, (c_tile, l_tile), 1)
        valid = col < l_total
        x = jnp.where(valid, x, -jnp.inf)

    m_old = m_acc[...]
    m_new = jnp.maximum(m_old, x)
    e = jnp.exp(x - m_new)
    if masked:
        e = jnp.where(valid, e, 0.0)
        # Lanes that never see valid data keep m == -inf; keep their l at 0.
        scale = jnp.where(m_new == -jnp.inf, 0.0, jnp.exp(m_old - m_new))
    else:
        scale = jnp.exp(m_old - m_new)
    l_acc[...] = l_acc[...] * scale + e
    m_acc[...] = m_new

    @pl.when(s == n_s - 1)
    def _():
        m_vec = m_acc[...]
        row_m = jnp.max(m_vec, axis=-1, keepdims=True)              # (c_tile, 1)
        row_l = jnp.sum(l_acc[...] * jnp.exp(m_vec - row_m),
                        axis=-1, keepdims=True)                     # (c_tile, 1)
        om_ref[...] = row_m.reshape(1, 1, c_tile, 1)
        ol_ref[...] = row_l.reshape(1, 1, c_tile, 1)


def _channel_lse_partials(x3):
    """Per (batch, channel) partial (max, sum-exp) over the flattened spatial axis."""
    n_batch, n_chan, l_total = x3.shape
    c_tile, l_tile = _pick_tiles(n_chan, l_total)
    n_cb = n_chan // c_tile
    n_s = -(-l_total // l_tile)
    masked = (n_s * l_tile) != l_total

    kernel = functools.partial(_partial_lse_kernel, c_tile=c_tile,
                               l_tile=l_tile, l_total=l_total, masked=masked)

    in_block = (pl.Squeezed(), c_tile, l_tile)
    in_map = lambda b, cb, s: (b, cb, s)
    if n_batch * n_cb * n_s >= 4:
        # Triple-buffer the input stream on real workloads to hide DMA jitter.
        in_spec = pl.BlockSpec(in_block, in_map, pipeline_mode=pl.Buffered(3))
    else:
        in_spec = pl.BlockSpec(in_block, in_map)

    out_struct = jax.ShapeDtypeStruct((n_batch, n_cb, c_tile, 1), jnp.float32)
    out_m_spec = pl.BlockSpec((1, 1, c_tile, 1), lambda b, cb, s: (b, cb, 0, 0))
    out_l_spec = pl.BlockSpec((1, 1, c_tile, 1), lambda b, cb, s: (b, cb, 0, 0))

    return pl.pallas_call(
        kernel,
        out_shape=(out_struct, out_struct),
        grid_spec=pltpu.PrefetchScalarGridSpec(
            num_scalar_prefetch=0,
            grid=(n_batch, n_cb, n_s),
            in_specs=[in_spec],
            out_specs=[out_m_spec, out_l_spec],
            scratch_shapes=[
                pltpu.VMEM((c_tile, l_tile), jnp.float32),   # running max
                pltpu.VMEM((c_tile, l_tile), jnp.float32),   # running sum of exp
            ],
        ),
        compiler_params=pltpu.CompilerParams(
            dimension_semantics=("parallel", "parallel", "arbitrary"),
            vmem_limit_bytes=_VMEM_LIMIT_BYTES,
        ),
    )(x3)


def _channel_logsumexp(predictions):
    """Per-channel logsumexp over all (batch, w, h) positions; NCHW input.

    The DMA stays in predictions.dtype (bf16 halves HBM traffic); the kernel
    upcasts to f32 internally, which is also the correct path on v5e.
    """
    n_batch, n_out, w, h = predictions.shape
    x3 = predictions.reshape(n_batch, n_out, w * h)   # free reshape, NCHW contiguous
    part_m, part_l = _channel_lse_partials(x3)        # (B, n_cb, c_tile, 1) each
    part_m = part_m.reshape(n_batch, n_out)
    part_l = part_l.reshape(n_batch, n_out)
    m = jnp.max(part_m, axis=0)                                        # (n_out,)
    return m + jnp.log(jnp.sum(part_l * jnp.exp(part_m - m[None, :]), axis=0))


def _targets2inds(targets):
    """Faithful port of the torch index bookkeeping (host-side numpy)."""
    dat = []
    for ii, s in enumerate(targets):
        s = np.asarray(s)
        if s.shape[0] > 0:
            y_ind = s[..., 1]
            x_ind = s[..., 0]
            batch_ind = np.full((s.shape[0],), ii, dtype=np.int32)
            dat.append((batch_ind, x_ind, y_ind))
    if dat:
        batch_ind = np.concatenate([d[0] for d in dat], axis=0)
        x_ind = np.concatenate([d[1] for d in dat], axis=0)
        y_ind = np.concatenate([d[2] for d in dat], axis=0)
        N, S = x_ind.shape
        x_ind = x_ind.reshape(-1).astype(np.int32)
        y_ind = y_ind.reshape(-1).astype(np.int32)
        batch_ind = np.broadcast_to(batch_ind[:, None], (N, S)).reshape(-1)
        ch_ind = np.broadcast_to(
            np.arange(S, dtype=np.int32)[None, :], (N, S)
        ).reshape(-1)
        return (batch_ind, ch_ind, y_ind, x_ind)
    z = np.zeros((0,), dtype=np.int32)
    return (z, z, z, z)


def maximum_likelihood_loss(predictions, targets):
    """forward(predictions, targets) of MaximumLikelihoodLoss (fused)."""
    lse = _channel_logsumexp(predictions)                    # (n_out,), f32
    batch_ind, ch_ind, y_ind, x_ind = _targets2inds(targets)
    b = jnp.asarray(batch_ind)
    c = jnp.asarray(ch_ind)
    y = jnp.asarray(y_ind)
    x = jnp.asarray(x_ind)
    logits = predictions[b, c, y, x].astype(jnp.float32)     # tiny keypoint gather
    keypoints = logits - lse[c]                              # log_softmax at keypoints
    # TODO(synk): like the PyTorch original, an all-empty target list yields a
    # mean over zero elements (NaN); no guard added to keep semantics equal.
    loss = -jnp.mean(keypoints)
    return PAF_FACTOR * loss


def _reference_loss(predictions, targets):
    """Pure-jnp reference (no Pallas) mirroring the torch module exactly."""
    n_batch, n_out, w, h = predictions.shape
    xm = jnp.transpose(predictions, (1, 0, 2, 3)).reshape(n_out, -1)
    xm = jax.nn.log_softmax(xm.astype(jnp.float32), axis=1)
    pred_l = jnp.transpose(xm.reshape(n_out, n_batch, w, h), (1, 0, 2, 3))
    b, c, y, xi = _targets2inds(targets)
    kp = pred_l[jnp.asarray(b), jnp.asarray(c), jnp.asarray(y), jnp.asarray(xi)]
    return PAF_FACTOR * (-jnp.mean(kp))


if __name__ == "__main__":
    key = jax.random.PRNGKey(0)
    k_pred, k_t0, k_t1 = jax.random.split(key, 3)

    n_batch, n_out, w, h = 2, 4, 16, 16  # NCHW, S == n_out
    predictions = jax.random.normal(k_pred, (n_batch, n_out, w, h), jnp.float32)

    # targets: list per batch element, each (N_i, S, 2) of (x, y) integer coords
    targets = [
        np.asarray(jax.random.randint(k_t0, (3, n_out, 2), 0, min(w, h))),
        np.asarray(jax.random.randint(k_t1, (2, n_out, 2), 0, min(w, h))),
    ]

    loss = jax.block_until_ready(maximum_likelihood_loss(predictions, targets))
    loss_ref = jax.block_until_ready(_reference_loss(predictions, targets))
    assert jnp.allclose(loss, loss_ref, atol=1e-6, rtol=1e-5), (loss, loss_ref)

    print("KERNEL_OK")
</pallas_src>

<mosaic_0001>
module attributes {stable_mosaic.version = 11 : i64} {
  func.func @_partial_lse_kernel(%arg0: i32, %arg1: i32, %arg2: i32, %arg3: memref<1x4x256xf32, #tpu.memory_space<vmem>>, %arg4: memref<1x1x4x1xf32, #tpu.memory_space<vmem>>, %arg5: memref<1x1x4x1xf32, #tpu.memory_space<vmem>>, %arg6: memref<4x256xf32, #tpu.memory_space<vmem>>, %arg7: memref<4x256xf32, #tpu.memory_space<vmem>>) attributes {dimension_semantics = [#tpu.dimension_semantics<parallel>, #tpu.dimension_semantics<parallel>, #tpu.dimension_semantics<arbitrary>], iteration_bounds = array<i64: 2, 1, 1>, scalar_prefetch = 0 : i64, scratch_operands = 2 : i64, tpu.core_type = #tpu.core_type<tc>, window_params = [{transform_indices = @transform_0, window_bounds = array<i64: 1, 4, 256>}, {transform_indices = @transform_1, window_bounds = array<i64: 1, 1, 4, 1>}, {transform_indices = @transform_2, window_bounds = array<i64: 1, 1, 4, 1>}]} {
    %c0_i32 = arith.constant 0 : i32
    %0 = arith.cmpi eq, %arg2, %c0_i32 : i32
    %1 = arith.extui %0 : i1 to i32
    %c0_i32_0 = arith.constant 0 : i32
    %2 = arith.cmpi ne, %1, %c0_i32_0 : i32
    scf.if %2 {
      %cst = arith.constant 0xFF800000 : f32
      %19 = vector.broadcast %cst : f32 to vector<4x256xf32>
      %c0_13 = arith.constant 0 : index
      %c0_14 = arith.constant 0 : index
      %20 = vector.load %arg6[%c0_13, %c0_14] : memref<4x256xf32, #tpu.memory_space<vmem>>, vector<4x256xf32>
      tpu.vector_store %arg6[%c0_13, %c0_14], %19 {strides = array<i32>} : memref<4x256xf32, #tpu.memory_space<vmem>>, vector<4x256xf32>,
      %cst_15 = arith.constant 0.000000e+00 : f32
      %21 = vector.broadcast %cst_15 : f32 to vector<4x256xf32>
      %c0_16 = arith.constant 0 : index
      %c0_17 = arith.constant 0 : index
      %22 = vector.load %arg7[%c0_16, %c0_17] : memref<4x256xf32, #tpu.memory_space<vmem>>, vector<4x256xf32>
      tpu.vector_store %arg7[%c0_16, %c0_17], %21 {strides = array<i32>} : memref<4x256xf32, #tpu.memory_space<vmem>>, vector<4x256xf32>,
    } else {
    }
    %c0 = arith.constant 0 : index
    %c0_1 = arith.constant 0 : index
    %c0_2 = arith.constant 0 : index
    %3 = vector.load %arg3[%c0, %c0_1, %c0_2] : memref<1x4x256xf32, #tpu.memory_space<vmem>>, vector<1x4x256xf32>
    %4 = vector.shape_cast %3 : vector<1x4x256xf32> to vector<4x256xf32>
    %c0_3 = arith.constant 0 : index
    %c0_4 = arith.constant 0 : index
    %5 = vector.load %arg6[%c0_3, %c0_4] : memref<4x256xf32, #tpu.memory_space<vmem>>, vector<4x256xf32>
    %6 = arith.maximumf %5, %4 : vector<4x256xf32>
    %7 = arith.subf %4, %6 : vector<4x256xf32>
    %8 = math.exp %7 : vector<4x256xf32>
    %9 = arith.subf %5, %6 : vector<4x256xf32>
    %10 = math.exp %9 : vector<4x256xf32>
    %c0_5 = arith.constant 0 : index
    %c0_6 = arith.constant 0 : index
    %11 = vector.load %arg7[%c0_5, %c0_6] : memref<4x256xf32, #tpu.memory_space<vmem>>, vector<4x256xf32>
    %12 = arith.mulf %11, %10 : vector<4x256xf32>
    %13 = arith.addf %12, %8 : vector<4x256xf32>
    %c0_7 = arith.constant 0 : index
    %c0_8 = arith.constant 0 : index
    %14 = vector.load %arg7[%c0_7, %c0_8] : memref<4x256xf32, #tpu.memory_space<vmem>>, vector<4x256xf32>
    tpu.vector_store %arg7[%c0_7, %c0_8], %13 {strides = array<i32>} : memref<4x256xf32, #tpu.memory_space<vmem>>, vector<4x256xf32>,
    %c0_9 = arith.constant 0 : index
    %c0_10 = arith.constant 0 : index
    %15 = vector.load %arg6[%c0_9, %c0_10] : memref<4x256xf32, #tpu.memory_space<vmem>>, vector<4x256xf32>
    tpu.vector_store %arg6[%c0_9, %c0_10], %6 {strides = array<i32>} : memref<4x256xf32, #tpu.memory_space<vmem>>, vector<4x256xf32>,
    %c0_i32_11 = arith.constant 0 : i32
    %16 = arith.cmpi eq, %arg2, %c0_i32_11 : i32
    %17 = arith.extui %16 : i1 to i32
    %c0_i32_12 = arith.constant 0 : i32
    %18 = arith.cmpi ne, %17, %c0_i32_12 : i32
    scf.if %18 {
      %c0_13 = arith.constant 0 : index
      %c0_14 = arith.constant 0 : index
      %19 = vector.load %arg6[%c0_13, %c0_14] : memref<4x256xf32, #tpu.memory_space<vmem>>, vector<4x256xf32>
      %cst = arith.constant dense<0xFF800000> : vector<4xf32>
      %20 = vector.multi_reduction <maximumf>, %19, %cst [1] : vector<4x256xf32> to vector<4xf32>
      %21 = vector.shape_cast %20 : vector<4xf32> to vector<4x1xf32>
      %c0_15 = arith.constant 0 : index
      %c0_16 = arith.constant 0 : index
      %22 = vector.load %arg7[%c0_15, %c0_16] : memref<4x256xf32, #tpu.memory_space<vmem>>, vector<4x256xf32>
      %23 = vector.broadcast %21 : vector<4x1xf32> to vector<4x256xf32>
      %24 = arith.subf %19, %23 : vector<4x256xf32>
      %25 = math.exp %24 : vector<4x256xf32>
      %26 = arith.mulf %22, %25 : vector<4x256xf32>
      %cst_17 = arith.constant dense<0.000000e+00> : vector<4xf32>
      %27 = vector.multi_reduction <add>, %26, %cst_17 [1] : vector<4x256xf32> to vector<4xf32>
      %28 = vector.shape_cast %27 : vector<4xf32> to vector<4x1xf32>
      %29 = vector.shape_cast %21 : vector<4x1xf32> to vector<1x1x4x1xf32>
      %c0_18 = arith.constant 0 : index
      %c0_19 = arith.constant 0 : index
      %c0_20 = arith.constant 0 : index
      %c0_21 = arith.constant 0 : index
      %30 = vector.load %arg4[%c0_18, %c0_19, %c0_20, %c0_21] : memref<1x1x4x1xf32, #tpu.memory_space<vmem>>, vector<1x1x4x1xf32>
      tpu.vector_store %arg4[%c0_18, %c0_19, %c0_20, %c0_21], %29 {strides = array<i32>} : memref<1x1x4x1xf32, #tpu.memory_space<vmem>>, vector<1x1x4x1xf32>,
      %31 = vector.shape_cast %28 : vector<4x1xf32> to vector<1x1x4x1xf32>
      %c0_22 = arith.constant 0 : index
      %c0_23 = arith.constant 0 : index
      %c0_24 = arith.constant 0 : index
      %c0_25 = arith.constant 0 : index
      %32 = vector.load %arg5[%c0_22, %c0_23, %c0_24, %c0_25] : memref<1x1x4x1xf32, #tpu.memory_space<vmem>>, vector<1x1x4x1xf32>
      tpu.vector_store %arg5[%c0_22, %c0_23, %c0_24, %c0_25], %31 {strides = array<i32>} : memref<1x1x4x1xf32, #tpu.memory_space<vmem>>, vector<1x1x4x1xf32>,
    } else {
    }
    return
  }
  func.func @transform_0(%arg0: i32, %arg1: i32, %arg2: i32) -> (i32, i32, i32) {
    %c0_i32 = arith.constant 0 : i32
    return %arg0, %arg1, %arg2 : i32, i32, i32
  }
  func.func @transform_1(%arg0: i32, %arg1: i32, %arg2: i32) -> (i32, i32, i32, i32) {
    %c0_i32 = arith.constant 0 : i32
    %c0_i32_0 = arith.constant 0 : i32
    %c0_i32_1 = arith.constant 0 : i32
    return %arg0, %arg1, %c0_i32, %c0_i32_0 : i32, i32, i32, i32
  }
  func.func @transform_2(%arg0: i32, %arg1: i32, %arg2: i32) -> (i32, i32, i32, i32) {
    %c0_i32 = arith.constant 0 : i32
    %c0_i32_0 = arith.constant 0 : i32
    %c0_i32_1 = arith.constant 0 : i32
    return %arg0, %arg1, %c0_i32, %c0_i32_0 : i32, i32, i32, i32
  }
}

</mosaic_0001>

<llo_original>
// kernel: tpu_custom_call.1
$region0: #{tpu_custom_call.1}
  #allocation0 [shape = 'u32[]', space=smem, size = 0x4, offset = 0x4, fixed_abs, tag = 'smem constant byte address 0x4 - core index']
  #allocation1 [shape = 'u32[144,128]{1,0:T(1,128)}', space=vmem, size = 0x12000, scoped, tag = 'internal scratch']
  #allocation2 [shape = 'f32[4,256]{1,0:T(4,128)}', space=vmem, size = 0x1000, scoped, tag = 'scratch operand']
  #allocation3 [shape = 'f32[4,256]{1,0:T(4,128)}', space=vmem, size = 0x1000, scoped, tag = 'scratch operand']
  %s0 = inlined_call_operand.hbm [shape: f32[2,4,256], index: 0, kind: input, shape index: {}]
  %s1 = inlined_call_operand.vmem [shape: f32[2,1,4,1], index: 1, kind: output, shape index: {0}]
  %s2 = inlined_call_operand.vmem [shape: f32[2,1,4,1], index: 2, kind: output, shape index: {1}]
  %3 = xla_tuple %s1, %s2
  %s4 = sld [smem:[#allocation0]]
  $region57: #{tpu_custom_call.1} parent=0
    _
  %s6 = ssub.s32 1, %s4
  %s7 = scalar_select 0, %s6, %s4
  $region1: #{tpu_custom_call.1} parent=0
    #allocation4 [shape = 'u8[8192]{0}', space=vmem, size = 0x2000, scoped, tag = 'input window, operand 0']
    #allocation5 [shape = 's32[2]{0}', space=sflag, size = 0x8, scoped, tag = 'scoped memory for tpu_custom_call.1']
    %8 = vsyncpa [#allocation5], 0
    %s9 = scalar_lea.sflag [#allocation5], 1
    %10 = vsyncpa %s9, 0
    loop: start=0, step=1, limit=4
    $region2: #{tpu_custom_call.1} parent=1 // loop_pre_header
      _
    $region3: #{tpu_custom_call.1} parent=1 // loop_header
      %s12 = sphi 0, %s16
      %p13 = scmp.ge.s32.totalorder %s12, 4
      %s19 = sphi 0, %s38
      %s20 = sphi 0, %s34
      %s21 = sphi 0, %s30
      %s22 = sphi 0, %s19
      %s23 = sphi 0, %s20
      %s24 = sphi 0, %s21
      %s25 = sphi 0, %s22
      %s26 = sphi 0, %s23
      %s27 = sphi 0, %s24
      %s45 = sphi 0, %s47
      %s48 = sphi 0, %s45
      %s49 = sphi 0, %s48
      %s65 = sphi 0, %s49
      %s73 = sphi 0, %s75
      %s76 = sphi 0, %s73
      %s77 = sphi 0, %s76
      %s93 = sphi 0, %s77
      %s101 = sphi 0, %s103
      %s104 = sphi 0, %s101
      %s105 = sphi 0, %s104
      %s121 = sphi 0, %s105
    $region4: #{tpu_custom_call.1} parent=1 // loop_header_branch
      %15 = sbr.rel (%p13) target = $region8
    $region5: #{tpu_custom_call.1} parent=1 // loop_body
      %s17 = ssub.s32 %s12, 1
      %s18 = ssub.s32 %s12, 2
      %s28 = sadd.s32 1, %s21
      %p29 = scmp.ge.s32.totalorder %s28, 1
      %s30 = scalar_select %p29, 0, %s28
      %s31 = sadd.s32 1, %s20
      %s32 = scalar_select %p29, %s31, %s20
      %p33 = scmp.ge.s32.totalorder %s32, 1
      %s34 = scalar_select %p33, 0, %s32
      %s35 = sadd.s32 1, %s19
      %s36 = scalar_select %p33, %s35, %s19
      %p37 = scmp.ge.s32.totalorder %s36, 2
      %s38 = scalar_select %p37, 0, %s36
      %s39 = ssub.s32 %s19, %s38
      %s40 = ssub.s32 %s20, %s34
      %s41 = sor.u32 %s39, %s40
      %s42 = ssub.s32 %s21, %s30
      %s43 = sor.u32 %s41, %s42
      %p44 = scmp.eq.s32.totalorder %s43, 0
      %s46 = sadd.s32 %s45, 1
      %s47 = scalar_select %p44, %s45, %s46
      %p50 = pneg %p44
      %p51 = scmp.eq.s32.totalorder %s12, 1
      %p52 = por %p50, %p51
      %p53 = scmp.ne.s32.totalorder %s45, %s48
      %p54 = scmp.eq.s32.totalorder %s12, 0
      %p55 = por %p53, %p54
      %p56 = scmp.ne.s32.totalorder %s45, %s48
      %p57 = scmp.eq.s32.totalorder %s17, 1
      %p58 = por %p56, %p57
      %p59 = scmp.ne.s32.totalorder %s48, %s49
      %p60 = scmp.eq.s32.totalorder %s17, 0
      %p61 = por %p59, %p60
      %p62 = scmp.ne.s32.totalorder %s48, %s49
      %p63 = scmp.eq.s32.totalorder %s18, 1
      %p64 = por %p62, %p63
      %p66 = scmp.ne.s32.totalorder %s49, %s65
      %p67 = scmp.eq.s32.totalorder %s18, 0
      %p68 = por %p66, %p67
      %s69 = ssub.s32 %s19, %s38
      %s70 = ssub.s32 %s20, %s34
      %s71 = sor.u32 %s69, %s70
      %p72 = scmp.eq.s32.totalorder %s71, 0
      %s74 = sadd.s32 %s73, 1
      %s75 = scalar_select %p72, %s73, %s74
      %p78 = pneg %p72
      %p79 = scmp.eq.s32.totalorder %s12, 1
      %p80 = por %p78, %p79
      %p81 = scmp.ne.s32.totalorder %s73, %s76
      %p82 = scmp.eq.s32.totalorder %s12, 0
      %p83 = por %p81, %p82
      %p84 = scmp.ne.s32.totalorder %s73, %s76
      %p85 = scmp.eq.s32.totalorder %s17, 1
      %p86 = por %p84, %p85
      %p87 = scmp.ne.s32.totalorder %s76, %s77
      %p88 = scmp.eq.s32.totalorder %s17, 0
      %p89 = por %p87, %p88
      %p90 = scmp.ne.s32.totalorder %s76, %s77
      %p91 = scmp.eq.s32.totalorder %s18, 1
      %p92 = por %p90, %p91
      %p94 = scmp.ne.s32.totalorder %s77, %s93
      %p95 = scmp.eq.s32.totalorder %s18, 0
      %p96 = por %p94, %p95
      %s97 = ssub.s32 %s19, %s38
      %s98 = ssub.s32 %s20, %s34
      %s99 = sor.u32 %s97, %s98
      %p100 = scmp.eq.s32.totalorder %s99, 0
      %s102 = sadd.s32 %s101, 1
      %s103 = scalar_select %p100, %s101, %s102
      %p106 = pneg %p100
      %p107 = scmp.eq.s32.totalorder %s12, 1
      %p108 = por %p106, %p107
      %p109 = scmp.ne.s32.totalorder %s101, %s104
      %p110 = scmp.eq.s32.totalorder %s12, 0
      %p111 = por %p109, %p110
      %p112 = scmp.ne.s32.totalorder %s101, %s104
      %p113 = scmp.eq.s32.totalorder %s17, 1
      %p114 = por %p112, %p113
      %p115 = scmp.ne.s32.totalorder %s104, %s105
      %p116 = scmp.eq.s32.totalorder %s17, 0
      %p117 = por %p115, %p116
      %p118 = scmp.ne.s32.totalorder %s104, %s105
      %p119 = scmp.eq.s32.totalorder %s18, 1
      %p120 = por %p118, %p119
      %p122 = scmp.ne.s32.totalorder %s105, %s121
      %p123 = scmp.eq.s32.totalorder %s18, 0
      %p124 = por %p122, %p123
      %p125 = scmp.le.s32.totalorder 1, %s12
      %p126 = scmp.lt.s32.totalorder %s12, 3
      %p127 = pnand %p125, %p126
      %p128 = pneg %p127
      // Predicated region
      $region9: #{tpu_custom_call.1} parent=5 // pred_check
        _
      $region10: #{tpu_custom_call.1} parent=5 // pred_check_branch
        %130 = sbr.rel (%p127) target = $region12
      $region11: #{tpu_custom_call.1} parent=5 // pred_region
        %s131 = ssub.s32 %s12, 1
      $region12: #{tpu_custom_call.1} parent=5 // pred_fallthru
        _
      %p132 = scmp.lt.s32.totalorder %s12, 2
      // Predicated region
      $region13: #{tpu_custom_call.1} parent=5 // pred_check
        %p133 = pneg %p132
      $region14: #{tpu_custom_call.1} parent=5 // pred_check_branch
        %135 = sbr.rel (%p133) target = $region16
      $region15: #{tpu_custom_call.1} parent=5 // pred_region
        // Predicated region
        $region17: #{tpu_custom_call.1} parent=15 // pred_check
          %p136 = pneg %p55
        $region18: #{tpu_custom_call.1} parent=15 // pred_check_branch
          %138 = sbr.rel (%p136) target = $region20
        $region19: #{tpu_custom_call.1} parent=15 // pred_region
          %s139 = sand.u32 %s45, 1
          %s140 = scalar_lea.sflag [#allocation5], %s139
          %s141 = sand.u32 %s45, 1
          %s142 = smul.addr %s141, 8
          %s143 = scalar_lea.vmem [#allocation4], %s142
          %s144 = smul.u32 2, %s21
          %s146 = ssub.s32 128, 128
          %147 = vsyncadd %s140, %s146
          %s148 = smul.addr %s20, 2
          %s149 = sadd.s32 %s144, %s148
          %s150 = smul.addr %s19, 2
          %s151 = sadd.s32 %s149, %s150
          %s152 = smul.addr %s151, 64
          %s153 = scalar_lea.hbm %s0, %s152
          %s155 = sshll.u32 %s143, 4
          %s156 = int_to_ptr.vmem [resolvable:$true] %s155
          %158 = dma.hbm_to_vmem [thread:$0]  %s153, 128, %s156, %s140
        $region20: #{tpu_custom_call.1} parent=15 // pred_fallthru
          _
      $region16: #{tpu_custom_call.1} parent=5 // pred_fallthru
        _
      %p159 = scmp.le.s32.totalorder 1, %s12
      %p160 = scmp.lt.s32.totalorder %s12, 3
      %p161 = pnand %p159, %p160
      %p162 = pneg %p161
      // Predicated region
      $region21: #{tpu_custom_call.1} parent=5 // pred_check
        _
      $region22: #{tpu_custom_call.1} parent=5 // pred_check_branch
        %164 = sbr.rel (%p161) target = $region24
      $region23: #{tpu_custom_call.1} parent=5 // pred_region
        %s165 = ssub.s32 %s12, 1
        %s166 = sand.u32 %s48, 1
        %s167 = scalar_lea.sflag [#allocation5], %s166
        %s168 = sand.u32 %s48, 1
        %s169 = smul.addr %s168, 8
        %s170 = scalar_lea.vmem [#allocation4], %s169
        // Predicated region
        $region25: #{tpu_custom_call.1} parent=23 // pred_check
          %p171 = pneg %p61
        $region26: #{tpu_custom_call.1} parent=23 // pred_check_branch
          %173 = sbr.rel (%p171) target = $region28
        $region27: #{tpu_custom_call.1} parent=23 // pred_region
          %174 = dma.done %s167, 128
        $region28: #{tpu_custom_call.1} parent=23 // pred_fallthru
          _
        %s175 = sand.u32 %s48, 1
        %s176 = scalar_lea.sflag [#allocation5], %s175
        %s177 = sand.u32 %s48, 1
        %s178 = smul.addr %s177, 8
        %s179 = scalar_lea.vmem [#allocation4], %s178
        %p180 = pneg %p61
        %p181 = pneg %p58
        %p182 = pneg %p89
        %p183 = pneg %p86
        %p184 = scmp.lt.s32.totalorder %s22, 1
        %s185 = scalar_select %p184, %s22, 1
        %p186 = scmp.lt.s32.totalorder %s23, 0
        %s187 = scalar_select %p186, %s23, 0
        %s188 = sadd.s32 %s187, %s185
        %s189 = smul.addr %s188, 4
        %s190 = scalar_lea.vmem %s1, %s189
        %p191 = pneg %p117
        %p192 = pneg %p114
        %p193 = scmp.lt.s32.totalorder %s22, 1
        %s194 = scalar_select %p193, %s22, 1
        %p195 = scmp.lt.s32.totalorder %s23, 0
        %s196 = scalar_select %p195, %s23, 0
        %s197 = sadd.s32 %s196, %s194
        %s198 = smul.addr %s197, 4
        %s199 = scalar_lea.vmem %s2, %s198
        %s200 = smul.u32 2, %s24
        %p201 = scmp.lt.s32.totalorder %s22, 1
        %s202 = scalar_select %p201, %s22, 1
        %p203 = scmp.lt.s32.totalorder %s23, 0
        %s204 = scalar_select %p203, %s23, 0
        %s205 = sadd.s32 %s204, %s202
        %s206 = smul.addr %s205, 4
        %s207 = scalar_lea.vmem %s1, %s206
        %p208 = scmp.lt.s32.totalorder %s22, 1
        %s209 = scalar_select %p208, %s22, 1
        %p210 = scmp.lt.s32.totalorder %s23, 0
        %s211 = scalar_select %p210, %s23, 0
        %s212 = sadd.s32 %s211, %s209
        %s213 = smul.addr %s212, 4
        %s214 = scalar_lea.vmem %s2, %s213
        %p215 = scmp.eq.s32.totalorder %s24, 0
        // Predicated region
        $region29: #{tpu_custom_call.1} parent=23 // pred_check
          %p216 = pneg %p215
        $region30: #{tpu_custom_call.1} parent=23 // pred_check_branch
          %218 = sbr.rel (%p216) target = $region32
        $region31: #{tpu_custom_call.1} parent=23 // pred_region
          %219 = vst [vmem:[#allocation2] sm:$0xff] -inf
          %220 = vst [vmem:[#allocation3] sm:$0xff] 0.0
        $region32: #{tpu_custom_call.1} parent=23 // pred_fallthru
          _
        %v221 = vld [vmem:[%s170] sm:$0xff]
        %v222 = vld [vmem:[#allocation2] sm:$0xff]
        %v223 = vmax.f32 %v222, %v221
        %v224 = vsub.f32 %v221, %v223
        %v225 = vmul.f32 %v224, 1.442695
        %v226 = vpow.pop %v225
        %v227 = vsub.f32 %v222, %v223
        %v228 = vmul.f32 %v227, 1.442695
        %v229 = vpow.pop %v228
        %v230 = vld [vmem:[#allocation3] sm:$0xff]
        %v231 = vmul.f32 %v230, %v229
        %v232 = vadd.f32 %v231, %v226
        %233 = vst [vmem:[#allocation3] sm:$0xff] %v232
        %234 = vst [vmem:[#allocation2] sm:$0xff] %v223
        // Predicated region
        $region33: #{tpu_custom_call.1} parent=23 // pred_check
          %p235 = pneg %p215
        $region34: #{tpu_custom_call.1} parent=23 // pred_check_branch
          %237 = sbr.rel (%p235) target = $region36
        $region35: #{tpu_custom_call.1} parent=23 // pred_region
          %v238 = vld [vmem:[#allocation2] sm:$0xff]
          %v240 = vcombine.high %v238, %v238
          %vm242 = vcmask 1043456
          %v243 = vsel %vm242, %v238, -inf
          %v244 = vsel %vm242, %v240, -inf
          %v245 = vmax.f32 %v243, %v244
          %246 = vmax.xlane.f32.xlu0 %v245
          %v247 = vpop.xlane.xlu0 %246
          %v248 = vld [vmem:[#allocation3] sm:$0xff]
          %v251 = vunpack.c.l.s4 839922192
          %v252 = vunpack.c.0.s8 %v251
          %v253 = vlaneseq
          %v254 = vshrl.u32 %v253, 7
          %v255 = vsub.s32 %v252, %v254
          %v256 = vrot.slane %v247, %v255
          %v258 = vsub.f32 %v238, %v256
          %v259 = vmul.f32 %v258, 1.442695
          %v260 = vpow.pop %v259
          %v261 = vmul.f32 %v248, %v260
          %v263 = vcombine.high %v261, %v261
          %v265 = vsel %vm242, %v261, 0.0
          %v266 = vsel %vm242, %v263, 0.0
          %v267 = vadd.f32 %v265, %v266
          %268 = vadd.xlane.f32.xlu0 %v267
          %v269 = vpop.xlane.xlu0 %268
          %vm270 = vcmask 3072
          %271 = vst.msk [vmem:[%s207] sm:$0xf] %vm270, %v247
          %272 = vst.msk [vmem:[%s214] sm:$0xf] %vm270, %v269
        $region36: #{tpu_custom_call.1} parent=23 // pred_fallthru
          _
        %p273 = scmp.lt.s32.totalorder %s22, 1
        %s274 = scalar_select %p273, %s22, 1
        %p275 = scmp.lt.s32.totalorder %s23, 0
        %s276 = scalar_select %p275, %s23, 0
        %s277 = sadd.s32 %s276, %s274
        %s278 = smul.addr %s277, 4
        %s279 = scalar_lea.vmem %s1, %s278
        %p280 = scmp.lt.s32.totalorder %s22, 1
        %s281 = scalar_select %p280, %s22, 1
        %p282 = scmp.lt.s32.totalorder %s23, 0
        %s283 = scalar_select %p282, %s23, 0
        %s284 = sadd.s32 %s283, %s281
        %s285 = smul.addr %s284, 4
        %s286 = scalar_lea.vmem %s2, %s285
        // Predicated region
        $region37: #{tpu_custom_call.1} parent=23 // pred_check
          %p287 = pneg %p86
        $region38: #{tpu_custom_call.1} parent=23 // pred_check_branch
          %289 = sbr.rel (%p287) target = $region40
        $region39: #{tpu_custom_call.1} parent=23 // pred_region
          _
        $region40: #{tpu_custom_call.1} parent=23 // pred_fallthru
          _
        // Predicated region
        $region41: #{tpu_custom_call.1} parent=23 // pred_check
          %p290 = pneg %p114
        $region42: #{tpu_custom_call.1} parent=23 // pred_check_branch
          %292 = sbr.rel (%p290) target = $region44
        $region43: #{tpu_custom_call.1} parent=23 // pred_region
          _
        $region44: #{tpu_custom_call.1} parent=23 // pred_fallthru
          _
      $region24: #{tpu_custom_call.1} parent=5 // pred_fallthru
        _
      %p293 = scmp.le.s32.totalorder 2, %s12
      // Predicated region
      $region45: #{tpu_custom_call.1} parent=5 // pred_check
        %p294 = pneg %p293
      $region46: #{tpu_custom_call.1} parent=5 // pred_check_branch
        %296 = sbr.rel (%p294) target = $region48
      $region47: #{tpu_custom_call.1} parent=5 // pred_region
        %s297 = ssub.s32 %s12, 2
        // Predicated region
        $region49: #{tpu_custom_call.1} parent=47 // pred_check
          %p298 = pneg %p92
        $region50: #{tpu_custom_call.1} parent=47 // pred_check_branch
          %300 = sbr.rel (%p298) target = $region52
        $region51: #{tpu_custom_call.1} parent=47 // pred_region
          %p301 = scmp.lt.s32.totalorder %s25, 1
          %s302 = scalar_select %p301, %s25, 1
          %p303 = scmp.lt.s32.totalorder %s26, 0
          %s304 = scalar_select %p303, %s26, 0
          %s305 = sadd.s32 %s304, %s302
          %s306 = smul.addr %s305, 4
          %s307 = scalar_lea.vmem %s1, %s306
        $region52: #{tpu_custom_call.1} parent=47 // pred_fallthru
          _
        // Predicated region
        $region53: #{tpu_custom_call.1} parent=47 // pred_check
          %p308 = pneg %p120
        $region54: #{tpu_custom_call.1} parent=47 // pred_check_branch
          %310 = sbr.rel (%p308) target = $region56
        $region55: #{tpu_custom_call.1} parent=47 // pred_region
          %p311 = scmp.lt.s32.totalorder %s25, 1
          %s312 = scalar_select %p311, %s25, 1
          %p313 = scmp.lt.s32.totalorder %s26, 0
          %s314 = scalar_select %p313, %s26, 0
          %s315 = sadd.s32 %s314, %s312
          %s316 = smul.addr %s315, 4
          %s317 = scalar_lea.vmem %s2, %s316
        $region56: #{tpu_custom_call.1} parent=47 // pred_fallthru
          _
      $region48: #{tpu_custom_call.1} parent=5 // pred_fallthru
        _
    $region6: #{tpu_custom_call.1} parent=1 // loop_footer
      %s16 = sadd.s32 1, %s12
    $region7: #{tpu_custom_call.1} parent=1 // loop_footer_branch
      %11 = sbr.rel target = $region3
    $region8: #{tpu_custom_call.1} parent=1 // loop_exit
      _
    %318 = vsyncpa [#allocation5], 1
    %s319 = scalar_lea.sflag [#allocation5], 1
    %320 = vsyncpa %s319, 1

</llo_original>
